<compile_context>
chip_gen: v5e
topology: v5e:2x2
jax: 0.10.0
libtpu: 0.0.40
codegen_flags: <defaults>
</compile_context>

<pallas_src>
import jax
import jax.numpy as jnp
from jax.experimental import pallas as pl
from jax.experimental.pallas import tpu as pltpu


_BN_EPS = 1e-5


# ----------------------------------------------------------------------------
# Fused forward kernel (everything on-chip, one invocation, no grid)
# ----------------------------------------------------------------------------

def _make_fused_kernel(num_layers, n_tgts):
    """Fused gnn1_embed (L x [SAGEConv -> relu -> BatchNorm1d]) + log_softmax.

    Ref order:
      inputs : x,
               A_0 .. A_{L-1}                       (dense bipartite adjacency, [n_tgt, n_src])
               W_0 .. W_{L-1}                       (stacked [W_l; W_r], [2*Cin_i, Cout_i])
               V_0 .. V_{L-1}                       (packed [b_l; gamma; beta], [3, Cout_i])
      output : log_softmax(x_embed)                 [n_tgt_{L-1}, hidden]  f32
    """

    def kernel(*refs):
        idx = 0
        x_ref = refs[idx]; idx += 1
        a_refs = refs[idx:idx + num_layers]; idx += num_layers
        w_refs = refs[idx:idx + num_layers]; idx += num_layers
        v_refs = refs[idx:idx + num_layers]; idx += num_layers
        out_ref = refs[idx]

        h = x_ref[...]
        for i in range(num_layers):
            # Row-normalised adjacency (PyG scatter-mean; zero-degree targets stay all-zero).
            a = a_refs[i][...]
            deg = jnp.sum(a, axis=-1, keepdims=True)
            a_mean = a * (1.0 / jnp.maximum(deg, 1.0))

            h_tgt = h[:n_tgts[i]]                                             # static slice
            agg = jnp.dot(a_mean, h, preferred_element_type=jnp.float32)      # [n_tgt, Cin]

            # Fused lin_l + lin_r:  [agg | x_target] @ [W_l; W_r] + b_l   (one MXU matmul)
            lhs = jnp.concatenate([agg, h_tgt], axis=-1)                      # [n_tgt, 2*Cin]
            vec = v_refs[i][...]
            bl, gamma, beta = vec[0:1, :], vec[1:2, :], vec[2:3, :]
            z = jnp.dot(lhs, w_refs[i][...], preferred_element_type=jnp.float32) + bl

            z = jnp.maximum(z, 0.0)                                           # relu

            # BatchNorm1d (training-mode batch stats, biased var) folded to scale/shift.
            mu = jnp.mean(z, axis=0, keepdims=True)
            var = jnp.mean((z - mu) * (z - mu), axis=0, keepdims=True)
            scale = jax.lax.rsqrt(var + _BN_EPS) * gamma
            shift = beta - mu * scale
            h = z * scale + shift

        # log_softmax over the feature dim (the value forward() returns).
        m = jnp.max(h, axis=-1, keepdims=True)
        zc = h - m
        lse = jnp.log(jnp.sum(jnp.exp(zc), axis=-1, keepdims=True))
        out_ref[...] = zc - lse

    return kernel


# ----------------------------------------------------------------------------
# Wrapper: one gridless pallas_call, whole-array VMEM blocks
# ----------------------------------------------------------------------------

def supervised_diffpool_forward(params, x, a_mats):
    """x: [n_src_0, in_channels];  a_mats: tuple of dense bipartite adjacencies
    A_i[n_tgt_i, n_src_i] with n_src_{i+1} == n_tgt_i (one per sampled hop / SAGE layer).
    Returns log_softmax(gnn1_embed(x), dim=-1) -- identical to the reference forward()."""
    num_layers = len(a_mats)
    n_tgts = tuple(int(a.shape[0]) for a in a_mats)
    embed = params["embed"]
    hidden = embed[-1][0].shape[1]
    n_last = n_tgts[-1]

    # Host-side (once): stack [W_l; W_r] along K, pack (b_l, gamma, beta) into one slab per layer.
    w_stacked, vec_slabs = [], []
    for (wl, bl, wr, gamma, beta) in embed:
        w_stacked.append(jnp.concatenate([wl, wr], axis=0))            # [2*Cin, Cout]
        vec_slabs.append(jnp.concatenate([bl, gamma, beta], axis=0))   # [3, Cout]

    flat = [x] + list(a_mats) + w_stacked + vec_slabs                  # 7 operands for L=2

    # Tiny-kernel cost hint for the XLA scheduler.
    flops = 0
    for i, a in enumerate(a_mats):
        nt, ns = int(a.shape[0]), int(a.shape[1])
        c_in, c_out = int(embed[i][0].shape[0]), int(embed[i][0].shape[1])
        flops += 2 * nt * ns * c_in               # A_mean @ h
        flops += 2 * nt * (2 * c_in) * c_out      # fused [agg|h_tgt] @ [W_l;W_r]
    transcendentals = n_last * hidden + 2 * num_layers * hidden
    bytes_accessed = sum(int(v.size) * 4 for v in flat) + n_last * hidden * 4

    vmem = pl.BlockSpec(memory_space=pltpu.MemorySpace.VMEM)
    out = pl.pallas_call(
        _make_fused_kernel(num_layers, n_tgts),
        out_shape=jax.ShapeDtypeStruct((n_last, hidden), jnp.float32),
        in_specs=[vmem] * len(flat),
        out_specs=vmem,
        cost_estimate=pl.CostEstimate(flops=flops,
                                      transcendentals=transcendentals,
                                      bytes_accessed=bytes_accessed),
    )(*flat)
    return out


# ----------------------------------------------------------------------------
# Parameters
# ----------------------------------------------------------------------------

def init_params(key, in_channels, hidden_channels, num_sage_layers, pool_clusters=20):
    def sage_bn_layer(k, cin, cout):
        k1, k2, k3 = jax.random.split(k, 3)
        wl = jax.random.normal(k1, (cin, cout), jnp.float32) / jnp.sqrt(float(cin))
        wr = jax.random.normal(k2, (cin, cout), jnp.float32) / jnp.sqrt(float(cin))
        bl = 0.01 * jax.random.normal(k3, (1, cout), jnp.float32)
        gamma = jnp.ones((1, cout), jnp.float32)   # BatchNorm1d init: weight = 1
        beta = jnp.zeros((1, cout), jnp.float32)   # BatchNorm1d init: bias   = 0
        return (wl, bl, wr, gamma, beta)

    def gnn(k, cin, chid, cout, n_layers):
        ks = jax.random.split(k, n_layers)
        layers = []
        for i in range(n_layers):
            ci = cin if i == 0 else chid
            co = cout if i == n_layers - 1 else chid
            layers.append(sage_bn_layer(ks[i], ci, co))
        return layers

    kp, ke = jax.random.split(key)
    return {
        # gnn1_pool params exist in the module but its output is discarded by forward(); unused.
        "pool": gnn(kp, in_channels, hidden_channels, pool_clusters, num_sage_layers),
        # gnn1_embed: SageForDiffPool(in, hidden, hidden, L) -- this is what forward() returns.
        "embed": gnn(ke, in_channels, hidden_channels, hidden_channels, num_sage_layers),
    }


# ----------------------------------------------------------------------------
# Main
# ----------------------------------------------------------------------------

if __name__ == "__main__":
    in_channels = 32
    hidden_channels = 128            # feature dim on the 128-lane axis -> lane-dense output
    num_sage_layers = 2
    n_src0, n_tgt0, n_tgt1 = 24, 16, 8   # sublane(8)-aligned node counts at every hop

    key = jax.random.PRNGKey(0)
    kx, ka0, ka1, kp = jax.random.split(key, 4)

    # node features [n_src_0, in_channels]
    x = jax.random.normal(kx, (n_src0, in_channels), jnp.float32)

    # dense bipartite adjacencies A[target, source], ~30% density, + a "self" edge per target
    def dense_adj(k, n_tgt, n_src, p=0.3):
        a = jax.random.bernoulli(k, p, (n_tgt, n_src)).astype(jnp.float32)
        return jnp.maximum(a, jnp.eye(n_tgt, n_src, dtype=jnp.float32))

    a_mats = (dense_adj(ka0, n_tgt0, n_src0), dense_adj(ka1, n_tgt1, n_tgt0))
    params = init_params(kp, in_channels, hidden_channels, num_sage_layers)

    fwd = jax.jit(supervised_diffpool_forward)
    out = jax.block_until_ready(fwd(params, x, a_mats))

    assert out.shape == (n_tgt1, hidden_channels)
    assert bool(jnp.all(jnp.isfinite(out)))
    # rows of log_softmax must sum to 1 in probability space
    assert bool(jnp.allclose(jnp.sum(jnp.exp(out), axis=-1), 1.0, atol=1e-4))

    print("KERNEL_OK")
</pallas_src>

<mosaic_0001>
module attributes {stable_mosaic.version = 11 : i64} {
  func.func @kernel(%arg0: memref<24x32xf32, #tpu.memory_space<vmem>>, %arg1: memref<16x24xf32, #tpu.memory_space<vmem>>, %arg2: memref<8x16xf32, #tpu.memory_space<vmem>>, %arg3: memref<64x128xf32, #tpu.memory_space<vmem>>, %arg4: memref<256x128xf32, #tpu.memory_space<vmem>>, %arg5: memref<3x128xf32, #tpu.memory_space<vmem>>, %arg6: memref<3x128xf32, #tpu.memory_space<vmem>>, %arg7: memref<8x128xf32, #tpu.memory_space<vmem>>) attributes {dimension_semantics = [], scalar_prefetch = 0 : i64, scratch_operands = 0 : i64, tpu.core_type = #tpu.core_type<tc>} {
    %c0 = arith.constant 0 : index
    %c0_0 = arith.constant 0 : index
    %0 = vector.load %arg0[%c0, %c0_0] : memref<24x32xf32, #tpu.memory_space<vmem>>, vector<24x32xf32>
    %c0_1 = arith.constant 0 : index
    %c0_2 = arith.constant 0 : index
    %1 = vector.load %arg1[%c0_1, %c0_2] : memref<16x24xf32, #tpu.memory_space<vmem>>, vector<16x24xf32>
    %cst = arith.constant dense<0.000000e+00> : vector<16xf32>
    %2 = vector.multi_reduction <add>, %1, %cst [1] : vector<16x24xf32> to vector<16xf32>
    %3 = vector.shape_cast %2 : vector<16xf32> to vector<16x1xf32>
    %cst_3 = arith.constant 1.000000e+00 : f32
    %4 = vector.broadcast %cst_3 : f32 to vector<16x1xf32>
    %5 = arith.maximumf %3, %4 : vector<16x1xf32>
    %cst_4 = arith.constant 1.000000e+00 : f32
    %6 = vector.broadcast %cst_4 : f32 to vector<16x1xf32>
    %7 = arith.divf %6, %5 : vector<16x1xf32>
    %8 = vector.broadcast %7 : vector<16x1xf32> to vector<16x24xf32>
    %9 = arith.mulf %1, %8 : vector<16x24xf32>
    %10 = vector.extract_strided_slice %0 {offsets = [0, 0], sizes = [16, 32], strides = [1, 1]} : vector<24x32xf32> to vector<16x32xf32>
    %cst_5 = arith.constant dense<0.000000e+00> : vector<16x32xf32>
    %11 = tpu.matmul %9, %0, %cst_5 {dimension_numbers = #tpu.dot_dimension_numbers<[1], [0], [0], [1], [0, 0, 1, 1], [], []>} : vector<16x24xf32>, vector<24x32xf32>, vector<16x32xf32> -> vector<16x32xf32>
    %12 = tpu.concatenate %11, %10 in 1 : vector<16x32xf32>, vector<16x32xf32> -> vector<16x64xf32>
    %c0_6 = arith.constant 0 : index
    %c0_7 = arith.constant 0 : index
    %13 = vector.load %arg5[%c0_6, %c0_7] : memref<3x128xf32, #tpu.memory_space<vmem>>, vector<3x128xf32>
    %14 = vector.extract_strided_slice %13 {offsets = [0, 0], sizes = [1, 128], strides = [1, 1]} : vector<3x128xf32> to vector<1x128xf32>
    %15 = vector.extract_strided_slice %13 {offsets = [1, 0], sizes = [1, 128], strides = [1, 1]} : vector<3x128xf32> to vector<1x128xf32>
    %16 = vector.extract_strided_slice %13 {offsets = [2, 0], sizes = [1, 128], strides = [1, 1]} : vector<3x128xf32> to vector<1x128xf32>
    %c0_8 = arith.constant 0 : index
    %c0_9 = arith.constant 0 : index
    %17 = vector.load %arg3[%c0_8, %c0_9] : memref<64x128xf32, #tpu.memory_space<vmem>>, vector<64x128xf32>
    %cst_10 = arith.constant dense<0.000000e+00> : vector<16x128xf32>
    %18 = tpu.matmul %12, %17, %cst_10 {dimension_numbers = #tpu.dot_dimension_numbers<[1], [0], [0], [1], [0, 0, 1, 1], [], []>} : vector<16x64xf32>, vector<64x128xf32>, vector<16x128xf32> -> vector<16x128xf32>
    %19 = vector.broadcast %14 : vector<1x128xf32> to vector<16x128xf32>
    %20 = arith.addf %18, %19 : vector<16x128xf32>
    %cst_11 = arith.constant 0.000000e+00 : f32
    %21 = vector.broadcast %cst_11 : f32 to vector<16x128xf32>
    %22 = arith.maximumf %20, %21 : vector<16x128xf32>
    %cst_12 = arith.constant dense<0.000000e+00> : vector<128xf32>
    %23 = vector.multi_reduction <add>, %22, %cst_12 [0] : vector<16x128xf32> to vector<128xf32>
    %24 = vector.shape_cast %23 : vector<128xf32> to vector<1x128xf32>
    %cst_13 = arith.constant 1.600000e+01 : f32
    %25 = vector.broadcast %cst_13 : f32 to vector<1x128xf32>
    %26 = arith.divf %24, %25 : vector<1x128xf32>
    %27 = vector.broadcast %26 : vector<1x128xf32> to vector<16x128xf32>
    %28 = arith.subf %22, %27 : vector<16x128xf32>
    %29 = vector.broadcast %26 : vector<1x128xf32> to vector<16x128xf32>
    %30 = arith.subf %22, %29 : vector<16x128xf32>
    %31 = arith.mulf %28, %30 : vector<16x128xf32>
    %cst_14 = arith.constant dense<0.000000e+00> : vector<128xf32>
    %32 = vector.multi_reduction <add>, %31, %cst_14 [0] : vector<16x128xf32> to vector<128xf32>
    %33 = vector.shape_cast %32 : vector<128xf32> to vector<1x128xf32>
    %cst_15 = arith.constant 1.600000e+01 : f32
    %34 = vector.broadcast %cst_15 : f32 to vector<1x128xf32>
    %35 = arith.divf %33, %34 : vector<1x128xf32>
    %cst_16 = arith.constant 9.99999974E-6 : f32
    %36 = vector.broadcast %cst_16 : f32 to vector<1x128xf32>
    %37 = arith.addf %35, %36 : vector<1x128xf32>
    %38 = math.rsqrt %37 : vector<1x128xf32>
    %39 = arith.mulf %38, %15 : vector<1x128xf32>
    %40 = arith.mulf %26, %39 : vector<1x128xf32>
    %41 = arith.subf %16, %40 : vector<1x128xf32>
    %42 = vector.broadcast %39 : vector<1x128xf32> to vector<16x128xf32>
    %43 = arith.mulf %22, %42 : vector<16x128xf32>
    %44 = vector.broadcast %41 : vector<1x128xf32> to vector<16x128xf32>
    %45 = arith.addf %43, %44 : vector<16x128xf32>
    %c0_17 = arith.constant 0 : index
    %c0_18 = arith.constant 0 : index
    %46 = vector.load %arg2[%c0_17, %c0_18] : memref<8x16xf32, #tpu.memory_space<vmem>>, vector<8x16xf32>
    %cst_19 = arith.constant dense<0.000000e+00> : vector<8xf32>
    %47 = vector.multi_reduction <add>, %46, %cst_19 [1] : vector<8x16xf32> to vector<8xf32>
    %48 = vector.shape_cast %47 : vector<8xf32> to vector<8x1xf32>
    %cst_20 = arith.constant 1.000000e+00 : f32
    %49 = vector.broadcast %cst_20 : f32 to vector<8x1xf32>
    %50 = arith.maximumf %48, %49 : vector<8x1xf32>
    %cst_21 = arith.constant 1.000000e+00 : f32
    %51 = vector.broadcast %cst_21 : f32 to vector<8x1xf32>
    %52 = arith.divf %51, %50 : vector<8x1xf32>
    %53 = vector.broadcast %52 : vector<8x1xf32> to vector<8x16xf32>
    %54 = arith.mulf %46, %53 : vector<8x16xf32>
    %55 = vector.extract_strided_slice %45 {offsets = [0, 0], sizes = [8, 128], strides = [1, 1]} : vector<16x128xf32> to vector<8x128xf32>
    %cst_22 = arith.constant dense<0.000000e+00> : vector<8x128xf32>
    %56 = tpu.matmul %54, %45, %cst_22 {dimension_numbers = #tpu.dot_dimension_numbers<[1], [0], [0], [1], [0, 0, 1, 1], [], []>} : vector<8x16xf32>, vector<16x128xf32>, vector<8x128xf32> -> vector<8x128xf32>
    %57 = tpu.concatenate %56, %55 in 1 : vector<8x128xf32>, vector<8x128xf32> -> vector<8x256xf32>
    %c0_23 = arith.constant 0 : index
    %c0_24 = arith.constant 0 : index
    %58 = vector.load %arg6[%c0_23, %c0_24] : memref<3x128xf32, #tpu.memory_space<vmem>>, vector<3x128xf32>
    %59 = vector.extract_strided_slice %58 {offsets = [0, 0], sizes = [1, 128], strides = [1, 1]} : vector<3x128xf32> to vector<1x128xf32>
    %60 = vector.extract_strided_slice %58 {offsets = [1, 0], sizes = [1, 128], strides = [1, 1]} : vector<3x128xf32> to vector<1x128xf32>
    %61 = vector.extract_strided_slice %58 {offsets = [2, 0], sizes = [1, 128], strides = [1, 1]} : vector<3x128xf32> to vector<1x128xf32>
    %c0_25 = arith.constant 0 : index
    %c0_26 = arith.constant 0 : index
    %62 = vector.load %arg4[%c0_25, %c0_26] : memref<256x128xf32, #tpu.memory_space<vmem>>, vector<256x128xf32>
    %cst_27 = arith.constant dense<0.000000e+00> : vector<8x128xf32>
    %63 = tpu.matmul %57, %62, %cst_27 {dimension_numbers = #tpu.dot_dimension_numbers<[1], [0], [0], [1], [0, 0, 1, 1], [], []>} : vector<8x256xf32>, vector<256x128xf32>, vector<8x128xf32> -> vector<8x128xf32>
    %64 = vector.broadcast %59 : vector<1x128xf32> to vector<8x128xf32>
    %65 = arith.addf %63, %64 : vector<8x128xf32>
    %cst_28 = arith.constant 0.000000e+00 : f32
    %66 = vector.broadcast %cst_28 : f32 to vector<8x128xf32>
    %67 = arith.maximumf %65, %66 : vector<8x128xf32>
    %cst_29 = arith.constant dense<0.000000e+00> : vector<128xf32>
    %68 = vector.multi_reduction <add>, %67, %cst_29 [0] : vector<8x128xf32> to vector<128xf32>
    %69 = vector.shape_cast %68 : vector<128xf32> to vector<1x128xf32>
    %cst_30 = arith.constant 8.000000e+00 : f32
    %70 = vector.broadcast %cst_30 : f32 to vector<1x128xf32>
    %71 = arith.divf %69, %70 : vector<1x128xf32>
    %72 = vector.broadcast %71 : vector<1x128xf32> to vector<8x128xf32>
    %73 = arith.subf %67, %72 : vector<8x128xf32>
    %74 = vector.broadcast %71 : vector<1x128xf32> to vector<8x128xf32>
    %75 = arith.subf %67, %74 : vector<8x128xf32>
    %76 = arith.mulf %73, %75 : vector<8x128xf32>
    %cst_31 = arith.constant dense<0.000000e+00> : vector<128xf32>
    %77 = vector.multi_reduction <add>, %76, %cst_31 [0] : vector<8x128xf32> to vector<128xf32>
    %78 = vector.shape_cast %77 : vector<128xf32> to vector<1x128xf32>
    %cst_32 = arith.constant 8.000000e+00 : f32
    %79 = vector.broadcast %cst_32 : f32 to vector<1x128xf32>
    %80 = arith.divf %78, %79 : vector<1x128xf32>
    %cst_33 = arith.constant 9.99999974E-6 : f32
    %81 = vector.broadcast %cst_33 : f32 to vector<1x128xf32>
    %82 = arith.addf %80, %81 : vector<1x128xf32>
    %83 = math.rsqrt %82 : vector<1x128xf32>
    %84 = arith.mulf %83, %60 : vector<1x128xf32>
    %85 = arith.mulf %71, %84 : vector<1x128xf32>
    %86 = arith.subf %61, %85 : vector<1x128xf32>
    %87 = vector.broadcast %84 : vector<1x128xf32> to vector<8x128xf32>
    %88 = arith.mulf %67, %87 : vector<8x128xf32>
    %89 = vector.broadcast %86 : vector<1x128xf32> to vector<8x128xf32>
    %90 = arith.addf %88, %89 : vector<8x128xf32>
    %cst_34 = arith.constant dense<0xFF800000> : vector<8xf32>
    %91 = vector.multi_reduction <maximumf>, %90, %cst_34 [1] : vector<8x128xf32> to vector<8xf32>
    %92 = vector.shape_cast %91 : vector<8xf32> to vector<8x1xf32>
    %93 = vector.broadcast %92 : vector<8x1xf32> to vector<8x128xf32>
    %94 = arith.subf %90, %93 : vector<8x128xf32>
    %95 = math.exp %94 : vector<8x128xf32>
    %cst_35 = arith.constant dense<0.000000e+00> : vector<8xf32>
    %96 = vector.multi_reduction <add>, %95, %cst_35 [1] : vector<8x128xf32> to vector<8xf32>
    %97 = vector.shape_cast %96 : vector<8xf32> to vector<8x1xf32>
    %98 = math.log %97 : vector<8x1xf32>
    %99 = vector.broadcast %98 : vector<8x1xf32> to vector<8x128xf32>
    %100 = arith.subf %94, %99 : vector<8x128xf32>
    %c0_36 = arith.constant 0 : index
    %c0_37 = arith.constant 0 : index
    %101 = vector.load %arg7[%c0_36, %c0_37] : memref<8x128xf32, #tpu.memory_space<vmem>>, vector<8x128xf32>
    tpu.vector_store %arg7[%c0_36, %c0_37], %100 {strides = array<i32>} : memref<8x128xf32, #tpu.memory_space<vmem>>, vector<8x128xf32>,
    return
  }
}

</mosaic_0001>

<llo_original>
// kernel: supervised_diffpool_forward.1
$region0: #{supervised_diffpool_forward.1}
  #allocation0 [shape = 'u32[]', space=smem, size = 0x4, offset = 0x4, fixed_abs, tag = 'smem constant byte address 0x4 - core index']
  #allocation1 [shape = 'u32[72,128]{1,0:T(1,128)}', space=vmem, size = 0x9000, scoped, tag = 'internal scratch']
  %s0 = inlined_call_operand.vmem [shape: f32[24,32], index: 0, kind: input, shape index: {}]
  %s1 = inlined_call_operand.vmem [shape: f32[16,24], index: 1, kind: input, shape index: {}]
  %s2 = inlined_call_operand.vmem [shape: f32[8,16], index: 2, kind: input, shape index: {}]
  %s3 = inlined_call_operand.vmem [shape: f32[64,128], index: 3, kind: input, shape index: {}]
  %s4 = inlined_call_operand.vmem [shape: f32[256,128], index: 4, kind: input, shape index: {}]
  %s5 = inlined_call_operand.vmem [shape: f32[3,128], index: 5, kind: input, shape index: {}]
  %s6 = inlined_call_operand.vmem [shape: f32[3,128], index: 6, kind: input, shape index: {}]
  %s7 = inlined_call_operand.hbm [shape: f32[8,128], index: 7, kind: output, shape index: {}]
  %s8 = sld [smem:[#allocation0]]
  $region38: #{supervised_diffpool_forward.1} parent=0
    _
  %s10 = ssub.s32 1, %s8
  %s11 = scalar_select 0, %s10, %s8
  $region1: #{supervised_diffpool_forward.1} parent=0
    #allocation2 [shape = 'u8[4096]{0}', space=vmem, size = 0x1000, scoped, tag = 'output window, operand 0, single buffered']
    #allocation3 [shape = 's32[1]{0}', space=sflag, size = 0x4, scoped, tag = 'scoped memory for supervised_diffpool_forward.1']
    %12 = vsyncpa [#allocation3], 0
    // Predicated region
    $region2: #{supervised_diffpool_forward.1} parent=1 // pred_check
      _
    $region3: #{supervised_diffpool_forward.1} parent=1 // pred_check_branch
      %14 = sbr.rel (0) target = $region5
    $region4: #{supervised_diffpool_forward.1} parent=1 // pred_region
      _
    $region5: #{supervised_diffpool_forward.1} parent=1 // pred_fallthru
      _
    // Predicated region
    $region6: #{supervised_diffpool_forward.1} parent=1 // pred_check
      _
    $region7: #{supervised_diffpool_forward.1} parent=1 // pred_check_branch
      %16 = sbr.rel (0) target = $region9
    $region8: #{supervised_diffpool_forward.1} parent=1 // pred_region
      _
    $region9: #{supervised_diffpool_forward.1} parent=1 // pred_fallthru
      _
    // Predicated region
    $region10: #{supervised_diffpool_forward.1} parent=1 // pred_check
      _
    $region11: #{supervised_diffpool_forward.1} parent=1 // pred_check_branch
      %18 = sbr.rel (0) target = $region13
    $region12: #{supervised_diffpool_forward.1} parent=1 // pred_region
      _
    $region13: #{supervised_diffpool_forward.1} parent=1 // pred_fallthru
      _
    // Predicated region
    $region14: #{supervised_diffpool_forward.1} parent=1 // pred_check
      _
    $region15: #{supervised_diffpool_forward.1} parent=1 // pred_check_branch
      %20 = sbr.rel (0) target = $region17
    $region16: #{supervised_diffpool_forward.1} parent=1 // pred_region
      _
    $region17: #{supervised_diffpool_forward.1} parent=1 // pred_fallthru
      _
    // Predicated region
    $region18: #{supervised_diffpool_forward.1} parent=1 // pred_check
      _
    $region19: #{supervised_diffpool_forward.1} parent=1 // pred_check_branch
      %22 = sbr.rel (0) target = $region21
    $region20: #{supervised_diffpool_forward.1} parent=1 // pred_region
      _
    $region21: #{supervised_diffpool_forward.1} parent=1 // pred_fallthru
      _
    // Predicated region
    $region22: #{supervised_diffpool_forward.1} parent=1 // pred_check
      _
    $region23: #{supervised_diffpool_forward.1} parent=1 // pred_check_branch
      %24 = sbr.rel (0) target = $region25
    $region24: #{supervised_diffpool_forward.1} parent=1 // pred_region
      _
    $region25: #{supervised_diffpool_forward.1} parent=1 // pred_fallthru
      _
    // Predicated region
    $region26: #{supervised_diffpool_forward.1} parent=1 // pred_check
      _
    $region27: #{supervised_diffpool_forward.1} parent=1 // pred_check_branch
      %26 = sbr.rel (0) target = $region29
    $region28: #{supervised_diffpool_forward.1} parent=1 // pred_region
      _
    $region29: #{supervised_diffpool_forward.1} parent=1 // pred_fallthru
      _
    %v27 = vld [vmem:[%s0] sm:$0xff]
    %v28 = vld [vmem:[%s0 + $0x8] sm:$0xff]
    %v29 = vld [vmem:[%s0 + $0x10] sm:$0xff]
    %v30 = vld [vmem:[%s1] sm:$0xff]
    %v31 = vld [vmem:[%s1 + $0x8] sm:$0xff]
    %vm32 = vcmask 195584
    %v33 = vsel %vm32, %v30, 0.0
    %34 = vadd.xlane.f32.xlu0 %v33
    %v35 = vpop.xlane.xlu0 %34
    %v36 = vsel %vm32, %v31, 0.0
    %37 = vadd.xlane.f32.xlu0 %v36
    %v38 = vpop.xlane.xlu0 %37
    %v39 = vmax.f32 %v35, 1.0
    %v40 = vmax.f32 %v38, 1.0
    %v41 = vrcp.pop %v39
    %v42 = vmul.f32 %v39, %v41
    %v43 = vsub.f32 1.0, %v42
    %v44 = vmul.f32 %v41, %v43
    %v45 = vadd.f32 %v41, %v44
    %vm46 = vweird.f32 %v39
    %vm47 = vweird.f32 %v41
    %vm48 = vmor %vm46, %vm47
    %v49 = vsel %vm48, %v41, %v45
    %v50 = vand.u32 2147483647, %v39
    %vm51 = vcmp.eq.f32.partialorder %v50, 8.507059e+37
    %v52 = vand.u32 %v39, 2147483648
    %v53 = vor.u32 1.1754944e-38, %v52
    %v54 = vsel %vm51, %v53, %v49
    %v55 = vmul.f32 1.0, %v54
    %v56 = vrcp.pop %v40
    %v57 = vmul.f32 %v40, %v56
    %v58 = vsub.f32 1.0, %v57
    %v59 = vmul.f32 %v56, %v58
    %v60 = vadd.f32 %v56, %v59
    %vm61 = vweird.f32 %v40
    %vm62 = vweird.f32 %v56
    %vm63 = vmor %vm61, %vm62
    %v64 = vsel %vm63, %v56, %v60
    %v65 = vand.u32 2147483647, %v40
    %vm66 = vcmp.eq.f32.partialorder %v65, 8.507059e+37
    %v67 = vand.u32 %v40, 2147483648
    %v68 = vor.u32 1.1754944e-38, %v67
    %v69 = vsel %vm66, %v68, %v64
    %v70 = vmul.f32 1.0, %v69
    %v71 = vmul.f32 %v30, %v55
    %v72 = vmul.f32 %v31, %v70
    %v74 = vsel %vm32, %v71, 0
    %v77 = vsel %vm32, %v72, 0
    %79 = vmatpush.msra.mxu0 0.0
    %80 = vmatpush.msra.mxu0 0.0
    %81 = vmatpush.msra.mxu0 0.0
    %82 = vmatpush.msra.mxu0 0.0
    %83 = vmatpush.msra.mxu0 0.0
    %84 = vmatpush.msra.mxu0 0.0
    %85 = vmatpush.msra.mxu0 0.0
    %86 = vmatpush.msra.mxu0 0.0
    %87 = vmatpush.msra.mxu0 0.0
    %88 = vmatpush.msra.mxu0 0.0
    %89 = vmatpush.msra.mxu0 0.0
    %90 = vmatpush.msra.mxu0 0.0
    %91 = vmatpush.msra.mxu0 0.0
    %92 = vmatpush.msra.mxu0 %v29
    %93 = vmatpush.msra.mxu0 %v28
    %94 = vmatpush.msra.mxu0 %v27
    %95 = vmatmul.f32.gmra.mxu0 %v74
    %v96 = vpop.f32.mrf.mxu0
    %v97 = vadd.f32 0.0, %v96
    %98 = vmatmul.f32.gmra.mxu0 %v77
    %v99 = vpop.f32.mrf.mxu0
    %v100 = vadd.f32 0.0, %v99
    %101 = vdwg.mxu0
    %104 = vrot.lane.b32.xlu0 %v27, 32
    %v105 = vpop.permute.xlu0 %104
    %106 = vrot.lane.b32.xlu0 %v28, 32
    %v107 = vpop.permute.xlu0 %106
    %vm110 = vcmask 261120
    %v111 = vsel %vm110, %v97, %v105
    %v112 = vsel %vm110, %v100, %v107
    %v113 = vld [vmem:[%s5] sm:$0x7]
    %v114 = vld [vmem:[%s3] sm:$0xff]
    %v115 = vld [vmem:[%s3 + $0x8] sm:$0xff]
    %v116 = vld [vmem:[%s3 + $0x10] sm:$0xff]
    %v117 = vld [vmem:[%s3 + $0x18] sm:$0xff]
    %v118 = vld [vmem:[%s3 + $0x20] sm:$0xff]
    %v119 = vld [vmem:[%s3 + $0x28] sm:$0xff]
    %v120 = vld [vmem:[%s3 + $0x30] sm:$0xff]
    %v121 = vld [vmem:[%s3 + $0x38] sm:$0xff]
    %v122 = vperm.slane %v113, 0
    %vm123 = vcmask 523264
    %v125 = vsel %vm123, %v111, 0
    %v128 = vsel %vm123, %v112, 0
    %130 = vmatpush.msra.mxu0 0.0
    %131 = vmatpush.msra.mxu0 0.0
    %132 = vmatpush.msra.mxu0 0.0
    %133 = vmatpush.msra.mxu0 0.0
    %134 = vmatpush.msra.mxu0 0.0
    %135 = vmatpush.msra.mxu0 0.0
    %136 = vmatpush.msra.mxu0 0.0
    %137 = vmatpush.msra.mxu0 0.0
    %138 = vmatpush.msra.mxu0 %v121
    %139 = vmatpush.msra.mxu0 %v120
    %140 = vmatpush.msra.mxu0 %v119
    %141 = vmatpush.msra.mxu0 %v118
    %142 = vmatpush.msra.mxu0 %v117
    %143 = vmatpush.msra.mxu0 %v116
    %144 = vmatpush.msra.mxu0 %v115
    %145 = vmatpush.msra.mxu0 %v114
    %146 = vmatmul.f32.gmra.mxu0 %v125
    %v147 = vpop.f32.mrf.mxu0
    %v148 = vadd.f32 %v122, %v147
    %149 = vmatmul.f32.gmra.mxu0 %v128
    %v150 = vpop.f32.mrf.mxu0
    %v151 = vadd.f32 %v122, %v150
    %152 = vdwg.mxu0
    %v153 = vmax.f32 %v148, 0.0
    %v154 = vmax.f32 %v151, 0.0
    %v155 = vadd.f32 %v153, %v154
    %v156 = vrot.slane %v155, 4
    %v157 = vadd.f32 %v155, %v156
    %v158 = vrot.slane %v157, 2
    %v159 = vadd.f32 %v157, %v158
    %v160 = vrot.slane %v159, 1
    %v161 = vadd.f32 %v159, %v160
    %v162 = vrcp.pop 16.0
    %v163 = vmul.f32 16.0, %v162
    %v164 = vsub.f32 1.0, %v163
    %v165 = vmul.f32 %v162, %v164
    %v166 = vadd.f32 %v162, %v165
    %vm167 = vweird.f32 %v162
    %v168 = vsel %vm167, %v162, %v166
    %v169 = vmul.f32 %v161, %v168
    %v170 = vsub.f32 %v153, %v169
    %v171 = vsub.f32 %v154, %v169
    %v172 = vmul.f32 %v170, %v170
    %v173 = vmul.f32 %v171, %v171
    %v174 = vadd.f32 %v172, %v173
    %v175 = vrot.slane %v174, 4
    %v176 = vadd.f32 %v174, %v175
    %v177 = vrot.slane %v176, 2
    %v178 = vadd.f32 %v176, %v177
    %v179 = vrot.slane %v178, 1
    %v180 = vadd.f32 %v178, %v179
    %v181 = vmul.f32 %v180, %v168
    %v182 = vadd.f32 %v181, 1e-05
    %v183 = vrsqrt.pop %v182
    %v184 = vmul.f32 %v183, %v182
    %v185 = vmul.f32 %v184, %v183
    %v186 = vmul.f32 0.5, %v185
    %v187 = vsub.f32 1.5, %v186
    %v188 = vmul.f32 %v183, %v187
    %vm189 = vweird.f32 %v182
    %vm190 = vweird.f32 %v183
    %vm191 = vmor %vm189, %vm190
    %v192 = vsel %vm191, %v183, %v188
    %v193 = vmul.f32 %v192, %v113
    %v194 = vmul.f32 %v169, %v193
    %v196 = vrot.slane %v194, 7
    %v198 = vsub.f32 %v113, %v196
    %v199 = vperm.slane %v193, 1
    %v200 = vmul.f32 %v153, %v199
    %v201 = vmul.f32 %v154, %v199
    %v202 = vperm.slane %v198, 2
    %v203 = vadd.f32 %v200, %v202
    %v204 = vadd.f32 %v201, %v202
    %v205 = vld [vmem:[%s2] sm:$0xff]
    %vm206 = vcmask 130048
    %v207 = vsel %vm206, %v205, 0.0
    %208 = vadd.xlane.f32.xlu0 %v207
    %v209 = vpop.xlane.xlu0 %208
    %v210 = vmax.f32 %v209, 1.0
    %v211 = vrcp.pop %v210
    %v212 = vmul.f32 %v210, %v211
    %v213 = vsub.f32 1.0, %v212
    %v214 = vmul.f32 %v211, %v213
    %v215 = vadd.f32 %v211, %v214
    %vm216 = vweird.f32 %v210
    %vm217 = vweird.f32 %v211
    %vm218 = vmor %vm216, %vm217
    %v219 = vsel %vm218, %v211, %v215
    %v220 = vand.u32 2147483647, %v210
    %vm221 = vcmp.eq.f32.partialorder %v220, 8.507059e+37
    %v222 = vand.u32 %v210, 2147483648
    %v223 = vor.u32 1.1754944e-38, %v222
    %v224 = vsel %vm221, %v223, %v219
    %v225 = vmul.f32 1.0, %v224
    %v226 = vmul.f32 %v205, %v225
    %v228 = vsel %vm206, %v226, 0
    %230 = vmatpush.msra.mxu0 0.0
    %231 = vmatpush.msra.mxu0 0.0
    %232 = vmatpush.msra.mxu0 0.0
    %233 = vmatpush.msra.mxu0 0.0
    %234 = vmatpush.msra.mxu0 0.0
    %235 = vmatpush.msra.mxu0 0.0
    %236 = vmatpush.msra.mxu0 0.0
    %237 = vmatpush.msra.mxu0 0.0
    %238 = vmatpush.msra.mxu0 0.0
    %239 = vmatpush.msra.mxu0 0.0
    %240 = vmatpush.msra.mxu0 0.0
    %241 = vmatpush.msra.mxu0 0.0
    %242 = vmatpush.msra.mxu0 0.0
    %243 = vmatpush.msra.mxu0 0.0
    %244 = vmatpush.msra.mxu0 %v204
    %245 = vmatpush.msra.mxu0 %v203
    %246 = vmatmul.f32.gmra.mxu0 %v228
    %v247 = vpop.f32.mrf.mxu0
    %v248 = vadd.f32 0.0, %v247
    %249 = vdwg.mxu0
    %v250 = vld [vmem:[%s6] sm:$0x7]
    %v251 = vld [vmem:[%s4] sm:$0xff]
    %v252 = vld [vmem:[%s4 + $0x8] sm:$0xff]
    %v253 = vld [vmem:[%s4 + $0x10] sm:$0xff]
    %v254 = vld [vmem:[%s4 + $0x18] sm:$0xff]
    %v255 = vld [vmem:[%s4 + $0x20] sm:$0xff]
    %v256 = vld [vmem:[%s4 + $0x28] sm:$0xff]
    %v257 = vld [vmem:[%s4 + $0x30] sm:$0xff]
    %v258 = vld [vmem:[%s4 + $0x38] sm:$0xff]
    %v259 = vld [vmem:[%s4 + $0x40] sm:$0xff]
    %v260 = vld [vmem:[%s4 + $0x48] sm:$0xff]
    %v261 = vld [vmem:[%s4 + $0x50] sm:$0xff]
    %v262 = vld [vmem:[%s4 + $0x58] sm:$0xff]
    %v263 = vld [vmem:[%s4 + $0x60] sm:$0xff]
    %v264 = vld [vmem:[%s4 + $0x68] sm:$0xff]
    %v265 = vld [vmem:[%s4 + $0x70] sm:$0xff]
    %v266 = vld [vmem:[%s4 + $0x78] sm:$0xff]
    %v267 = vld [vmem:[%s4 + $0x80] sm:$0xff]
    %v268 = vld [vmem:[%s4 + $0x88] sm:$0xff]
    %v269 = vld [vmem:[%s4 + $0x90] sm:$0xff]
    %v270 = vld [vmem:[%s4 + $0x98] sm:$0xff]
    %v271 = vld [vmem:[%s4 + $0xa0] sm:$0xff]
    %v272 = vld [vmem:[%s4 + $0xa8] sm:$0xff]
    %v273 = vld [vmem:[%s4 + $0xb0] sm:$0xff]
    %v274 = vld [vmem:[%s4 + $0xb8] sm:$0xff]
    %v275 = vld [vmem:[%s4 + $0xc0] sm:$0xff]
    %v276 = vld [vmem:[%s4 + $0xc8] sm:$0xff]
    %v277 = vld [vmem:[%s4 + $0xd0] sm:$0xff]
    %v278 = vld [vmem:[%s4 + $0xd8] sm:$0xff]
    %v279 = vld [vmem:[%s4 + $0xe0] sm:$0xff]
    %v280 = vld [vmem:[%s4 + $0xe8] sm:$0xff]
    %v281 = vld [vmem:[%s4 + $0xf0] sm:$0xff]
    %v282 = vld [vmem:[%s4 + $0xf8] sm:$0xff]
    %v283 = vperm.slane %v250, 0
    %284 = vmatpush.msra.mxu0 %v266
    %285 = vmatpush.msra.mxu0 %v265
    %286 = vmatpush.msra.mxu0 %v264
    %287 = vmatpush.msra.mxu0 %v263
    %288 = vmatpush.msra.mxu0 %v262
    %289 = vmatpush.msra.mxu0 %v261
    %290 = vmatpush.msra.mxu0 %v260
    %291 = vmatpush.msra.mxu0 %v259
    %292 = vmatpush.msra.mxu0 %v258
    %293 = vmatpush.msra.mxu0 %v257
    %294 = vmatpush.msra.mxu0 %v256
    %295 = vmatpush.msra.mxu0 %v255
    %296 = vmatpush.msra.mxu0 %v254
    %297 = vmatpush.msra.mxu0 %v253
    %298 = vmatpush.msra.mxu0 %v252
    %299 = vmatpush.msra.mxu0 %v251
    %300 = vmatmul.f32.gmra.mxu0 %v248
    %v301 = vpop.f32.mrf.mxu0
    %v302 = vadd.f32 %v283, %v301
    %303 = vdwg.mxu0
    %304 = vmatpush.msra.mxu0 %v282
    %305 = vmatpush.msra.mxu0 %v281
    %306 = vmatpush.msra.mxu0 %v280
    %307 = vmatpush.msra.mxu0 %v279
    %308 = vmatpush.msra.mxu0 %v278
    %309 = vmatpush.msra.mxu0 %v277
    %310 = vmatpush.msra.mxu0 %v276
    %311 = vmatpush.msra.mxu0 %v275
    %312 = vmatpush.msra.mxu0 %v274
    %313 = vmatpush.msra.mxu0 %v273
    %314 = vmatpush.msra.mxu0 %v272
    %315 = vmatpush.msra.mxu0 %v271
    %316 = vmatpush.msra.mxu0 %v270
    %317 = vmatpush.msra.mxu0 %v269
    %318 = vmatpush.msra.mxu0 %v268
    %319 = vmatpush.msra.mxu0 %v267
    %320 = vmatmul.f32.gmra.mxu0 %v203
    %v321 = vpop.f32.mrf.mxu0
    %v322 = vadd.f32 %v302, %v321
    %323 = vdwg.mxu0
    %v324 = vmax.f32 %v322, 0.0
    %v325 = vrot.slane %v324, 4
    %v326 = vadd.f32 %v324, %v325
    %v327 = vrot.slane %v326, 2
    %v328 = vadd.f32 %v326, %v327
    %v329 = vrot.slane %v328, 1
    %v330 = vadd.f32 %v328, %v329
    %v331 = vrcp.pop 8.0
    %v332 = vmul.f32 8.0, %v331
    %v333 = vsub.f32 1.0, %v332
    %v334 = vmul.f32 %v331, %v333
    %v335 = vadd.f32 %v331, %v334
    %vm336 = vweird.f32 %v331
    %v337 = vsel %vm336, %v331, %v335
    %v338 = vmul.f32 %v330, %v337
    %v339 = vsub.f32 %v324, %v338
    %v340 = vmul.f32 %v339, %v339
    %v341 = vrot.slane %v340, 4
    %v342 = vadd.f32 %v340, %v341
    %v343 = vrot.slane %v342, 2
    %v344 = vadd.f32 %v342, %v343
    %v345 = vrot.slane %v344, 1
    %v346 = vadd.f32 %v344, %v345
    %v347 = vmul.f32 %v346, %v337
    %v348 = vadd.f32 %v347, 1e-05
    %v349 = vrsqrt.pop %v348
    %v350 = vmul.f32 %v349, %v348
    %v351 = vmul.f32 %v350, %v349
    %v352 = vmul.f32 0.5, %v351
    %v353 = vsub.f32 1.5, %v352
    %v354 = vmul.f32 %v349, %v353
    %vm355 = vweird.f32 %v348
    %vm356 = vweird.f32 %v349
    %vm357 = vmor %vm355, %vm356
    %v358 = vsel %vm357, %v349, %v354
    %v359 = vmul.f32 %v358, %v250
    %v360 = vmul.f32 %v338, %v359
    %v362 = vrot.slane %v360, 7
    %v364 = vsub.f32 %v250, %v362
    %v365 = vperm.slane %v359, 1
    %v366 = vmul.f32 %v324, %v365
    %v367 = vperm.slane %v364, 2
    %v368 = vadd.f32 %v366, %v367
    %369 = vmax.xlane.f32.xlu0 %v368
    %v370 = vpop.xlane.xlu0 %369
    %v371 = vsub.f32 %v368, %v370
    %v372 = vmul.f32 %v371, 1.442695
    %v373 = vpow.pop %v372
    %374 = vadd.xlane.f32.xlu0 %v373
    %v375 = vpop.xlane.xlu0 %374
    %v376 = vlog2.pop %v375
    %v377 = vmul.f32 %v376, 0.6931472
    %v378 = vsub.f32 %v371, %v377
    %379 = vst [vmem:[#allocation2] sm:$0xff] %v378
    // Predicated region
    $region30: #{supervised_diffpool_forward.1} parent=1 // pred_check
      _
    $region31: #{supervised_diffpool_forward.1} parent=1 // pred_check_branch
      %381 = sbr.rel (0) target = $region33
    $region32: #{supervised_diffpool_forward.1} parent=1 // pred_region
      %383 = vsyncadd [#allocation3], 0
      %s385 = sshll.u32 [#allocation2], 4
      %s386 = int_to_ptr.vmem [resolvable:$true] %s385
      %s387 = sshll.u32 %s7, 4
      %s388 = int_to_ptr.hbm [resolvable:$true] %s387
      %390 = dma.vmem_to_hbm [thread:$0]  %s386, 128, %s388, [#allocation3]
    $region33: #{supervised_diffpool_forward.1} parent=1 // pred_fallthru
      _
    // Predicated region
    $region34: #{supervised_diffpool_forward.1} parent=1 // pred_check
      _
    $region35: #{supervised_diffpool_forward.1} parent=1 // pred_check_branch
      %392 = sbr.rel (0) target = $region37
    $region36: #{supervised_diffpool_forward.1} parent=1 // pred_region
      %394 = dma.done [#allocation3], 128
    $region37: #{supervised_diffpool_forward.1} parent=1 // pred_fallthru
      _
    %395 = vsyncpa [#allocation3], 1

</llo_original>
